<compile_context>
chip_gen: v7x
topology: tpu7x:2x2x1
jax: 0.10.0
libtpu: 0.0.40
codegen_flags: <defaults>
</compile_context>

<pallas_src>
import functools
import math

import jax
import jax.numpy as jnp
from jax import lax
from jax.experimental import pallas as pl
from jax.experimental.pallas import tpu as pltpu


# ---------------------------------------------------------------------------
# Parameter ("buffer") setup: sin/cos table, exactly as in the PyTorch __init__.
# Build it directly in the model dtype so no per-call full-table cast is needed.
# ---------------------------------------------------------------------------
def make_positional_encoding_table(d_model: int, max_len: int = 5000,
                                   dtype=jnp.float32) -> jnp.ndarray:
    position = jnp.arange(max_len, dtype=jnp.float32)[:, None]            # (L, 1)
    div_term = jnp.exp(jnp.arange(0, d_model, 2, dtype=jnp.float32)
                       * (-math.log(10000.0) / d_model))                  # (D/2,)
    pe = jnp.zeros((max_len, d_model), dtype=jnp.float32)
    pe = pe.at[:, 0::2].set(jnp.sin(position * div_term))
    pe = pe.at[:, 1::2].set(jnp.cos(position * div_term))
    return pe.astype(dtype)                                               # (L, D)


# ---------------------------------------------------------------------------
# Kernels
# ---------------------------------------------------------------------------
def _pe_add_kernel(x_ref, pe_ref, o_ref):
    # x_ref: (tS, B, D); pe_ref: (tS, 1, D) -> broadcast over batch (sublane bcast).
    # pe arrives already in x.dtype.
    # TODO(synk): on v5e (no bf16 VALU) upcast bf16 blocks to f32 for the add.
    o_ref[...] = x_ref[...] + pe_ref[...]


# Odd 32-bit mixing constants (two's-complement int32 values of the usual
# 0x9E3779B9 / 0x85EBCA6B / 0xC2B2AE35 hash constants).
_C_MUL1 = -1640531527
_C_MUL2 = -2048144789
_C_SEED = -1028477387


def _pe_add_dropout_kernel(seed_ref, x_ref, pe_ref, o_ref, *, p, use_hw_prng):
    # Training-mode inverted dropout, scale 1/(1-p). RNG stream differs from
    # torch; semantics (per-element Bernoulli keep with prob 1-p) match.
    tS, B, D = x_ref.shape
    y = x_ref[...] + pe_ref[...]

    # Keep-threshold: P(keep) = 1 - p up to a 2^-32 quantization of p.
    t_unsigned = min(int(float(p) * 4294967296.0), 4294967295)
    t_signed = t_unsigned - 2147483648

    if use_hw_prng:
        # Real TPU: hardware PRNG (cheapest VPU path). Distinct seed *words*
        # per tile — avoids adjacent-integer-seed correlation.
        pltpu.prng_seed(seed_ref[0], pl.program_id(0))
        bits = pltpu.prng_random_bits(y.shape)
        if bits.dtype == jnp.uint32:
            keep = bits >= jnp.uint32(t_unsigned)
        else:
            keep = bits >= jnp.int32(t_signed)
    else:
        # Portable counter-based hash (int32 jnp ops only: works in interpret
        # mode / CPU and lowers on Mosaic). Keyed by the GLOBAL element index,
        # so every tile draws from one decorrelated stream.
        # TODO(synk): for bf16 on v7x, pack 2 elements per 32-bit draw to cut
        # VPU work if this path is ever used on hardware.
        i = pl.program_id(0)
        s_idx = lax.broadcasted_iota(jnp.int32, y.shape, 0) + i * tS
        b_idx = lax.broadcasted_iota(jnp.int32, y.shape, 1)
        d_idx = lax.broadcasted_iota(jnp.int32, y.shape, 2)
        lin = (s_idx * B + b_idx) * D + d_idx                     # global index
        h = (lin + seed_ref[0] * jnp.int32(_C_SEED)) * jnp.int32(_C_MUL1)
        h = h ^ (h << 13)
        h = h * jnp.int32(_C_MUL2)
        keep = h >= jnp.int32(t_signed)

    scale = jnp.asarray(1.0 / (1.0 - p), dtype=y.dtype)
    o_ref[...] = jnp.where(keep, y * scale, jnp.zeros_like(y))


# ---------------------------------------------------------------------------
# Tile sizing. The kernel is purely HBM-bound, so use big blocks (amortize the
# ~0.35 us per-grid-step overhead) while staying inside a VMEM budget that is
# honest about sublane padding (B < 8/16) and lane padding (D < 128).
# Budget covers the whole double-buffered working set: 2 x (x + out + pe).
# ---------------------------------------------------------------------------
_LANE = 128
_TOTAL_VMEM_BUDGET = 28 * 1024 * 1024    # ~6-7 MiB x blocks at typical shapes


def _round_up(v: int, m: int) -> int:
    return -(-v // m) * m


def _padded_row_bytes(B: int, D: int, itemsize: int):
    sub = max(8, 32 // itemsize)                   # sublane multiple: 8/16/32
    pad_b = _round_up(B, sub)
    pad_d = _round_up(D, _LANE)
    row_x = pad_b * pad_d * itemsize               # one seq row of an x/out block
    row_pe = sub * pad_d * itemsize                # one seq row of the (tS,1,D) pe block
    return row_x, row_pe


def _choose_seq_tile(S: int, B: int, D: int, itemsize: int) -> int:
    row_x, row_pe = _padded_row_bytes(B, D, itemsize)
    per_row = 2 * (2 * row_x + row_pe)             # double-buffered x + out + pe
    tS = max(1, _TOTAL_VMEM_BUDGET // per_row)
    tS = min(tS, S)
    if tS >= 8:
        tS = (tS // 8) * 8
    # v7x megacore: keep >= 2 grid tiles so both TensorCores get work.
    if S > 8 and tS >= S:
        tS = _round_up(pl.cdiv(S, 2), 8)
    return tS


# ---------------------------------------------------------------------------
# Wrapper: tiled pallas_call over the sequence axis.
# ---------------------------------------------------------------------------
def positional_encoding(x, pe, *, dropout_p: float = 0.1,
                        training: bool = False, seed: int = 0):
    S, B, D = x.shape
    if pe.ndim == 3:                       # accept torch-style (max_len, 1, d_model)
        pe = pe.reshape(pe.shape[0], pe.shape[-1])
    assert pe.shape[0] >= S and pe.shape[1] == D

    if pe.dtype != x.dtype:
        # Lazy cast of only the rows we need — never the full max_len table.
        pe = pe[:S].astype(x.dtype)
    pe3 = pe.reshape(pe.shape[0], 1, D)    # (L,1,D): batch bcast is a sublane bcast

    itemsize = jnp.dtype(x.dtype).itemsize
    tS = _choose_seq_tile(S, B, D, itemsize)
    grid = (pl.cdiv(S, tS),)

    x_spec = pl.BlockSpec((tS, B, D), lambda i: (i, 0, 0))
    pe_spec = pl.BlockSpec((tS, 1, D), lambda i: (i, 0, 0))
    out_spec = pl.BlockSpec((tS, B, D), lambda i: (i, 0, 0))
    out_shape = jax.ShapeDtypeStruct(x.shape, x.dtype)

    # VMEM limit: cover the padded, double-buffered footprint; raise past the
    # v5e 16 MiB default scoped limit but stay <= 48 MiB for v7x (64 MiB phys).
    row_x, row_pe = _padded_row_bytes(B, D, itemsize)
    footprint = 2 * tS * (2 * row_x + row_pe)
    vmem_limit = int(min(48 << 20, max(32 << 20, footprint + (4 << 20))))
    cparams = pltpu.CompilerParams(dimension_semantics=("parallel",),
                                   vmem_limit_bytes=vmem_limit)

    # TODO(synk): if d_model < 128 at real sizes, fold B*D into the last axis
    # for lane-dense stores; real transformer D >= 128 so not done here.
    cost = pl.CostEstimate(flops=S * B * D, transcendentals=0,
                           bytes_accessed=2 * x.size * itemsize + S * D * itemsize)

    if (not training) or dropout_p == 0.0:
        # Eval-mode forward: x + pe[:S]; dropout is identity.
        return pl.pallas_call(
            _pe_add_kernel,
            grid=grid,
            in_specs=[x_spec, pe_spec],
            out_specs=out_spec,
            out_shape=out_shape,
            input_output_aliases={0: 0},     # x's buffer donated to the output
            compiler_params=cparams,
            cost_estimate=cost,
        )(x, pe3)

    seed_arr = jnp.array([seed], dtype=jnp.int32)
    use_hw_prng = jax.default_backend() == "tpu"
    kernel = functools.partial(_pe_add_dropout_kernel, p=float(dropout_p),
                               use_hw_prng=use_hw_prng)
    return pl.pallas_call(
        kernel,
        grid=grid,
        in_specs=[pl.BlockSpec(memory_space=pltpu.MemorySpace.SMEM),
                  x_spec, pe_spec],
        out_specs=out_spec,
        out_shape=out_shape,
        input_output_aliases={1: 0},         # x's buffer donated to the output
        compiler_params=cparams,
        cost_estimate=cost,
    )(seed_arr, x, pe3)


# ---------------------------------------------------------------------------
# Demo / self-check
# ---------------------------------------------------------------------------
if __name__ == "__main__":
    d_model = 32
    max_len = 64
    seq_len = 8
    batch = 2
    dropout_p = 0.1

    key = jax.random.PRNGKey(0)
    x = jax.random.normal(key, (seq_len, batch, d_model), dtype=jnp.float32)
    pe = make_positional_encoding_table(d_model, max_len, dtype=x.dtype)

    # Plain-JAX reference (computed before the kernel calls).
    ref = x + pe[:seq_len][:, None, :]

    # Eval-mode forward (dropout == identity), matching PyTorch model.eval().
    out_eval = positional_encoding(x, pe, dropout_p=dropout_p, training=False)
    out_eval = jax.block_until_ready(out_eval)
    assert out_eval.shape == x.shape and out_eval.dtype == x.dtype
    assert jnp.allclose(out_eval, ref, atol=1e-6, rtol=1e-6)

    # Training-mode forward: every element is either 0 (dropped) or
    # (x + pe) / (1 - p) (kept).
    out_train = positional_encoding(x, pe, dropout_p=dropout_p,
                                    training=True, seed=0)
    out_train = jax.block_until_ready(out_train)
    assert out_train.shape == x.shape and out_train.dtype == x.dtype
    scaled = ref / (1.0 - dropout_p)
    ok = (jnp.isclose(out_train, 0.0, atol=1e-6)
          | jnp.isclose(out_train, scaled, atol=1e-5, rtol=1e-5))
    assert bool(jnp.all(ok))

    print("KERNEL_OK")
</pallas_src>

<mosaic_0001>
module attributes {stable_mosaic.version = 11 : i64} {
  func.func @_pe_add_kernel(%arg0: i32, %arg1: memref<8x2x32xf32, #tpu.memory_space<vmem>>, %arg2: memref<8x1x32xf32, #tpu.memory_space<vmem>>, %arg3: memref<8x2x32xf32, #tpu.memory_space<vmem>>) attributes {dimension_semantics = [#tpu.dimension_semantics<parallel>], iteration_bounds = array<i64: 1>, scalar_prefetch = 0 : i64, scratch_operands = 0 : i64, tpu.core_type = #tpu.core_type<tc>, window_params = [{transform_indices = @transform_0, window_bounds = array<i64: 8, 2, 32>}, {transform_indices = @transform_1, window_bounds = array<i64: 8, 1, 32>}, {transform_indices = @transform_2, window_bounds = array<i64: 8, 2, 32>}]} {
    %c0 = arith.constant 0 : index
    %c0_0 = arith.constant 0 : index
    %c0_1 = arith.constant 0 : index
    %0 = vector.load %arg1[%c0, %c0_0, %c0_1] : memref<8x2x32xf32, #tpu.memory_space<vmem>>, vector<8x2x32xf32>
    %c0_2 = arith.constant 0 : index
    %c0_3 = arith.constant 0 : index
    %c0_4 = arith.constant 0 : index
    %1 = vector.load %arg2[%c0_2, %c0_3, %c0_4] : memref<8x1x32xf32, #tpu.memory_space<vmem>>, vector<8x1x32xf32>
    %2 = vector.broadcast %1 : vector<8x1x32xf32> to vector<8x2x32xf32>
    %3 = arith.addf %0, %2 : vector<8x2x32xf32>
    %c0_5 = arith.constant 0 : index
    %c0_6 = arith.constant 0 : index
    %c0_7 = arith.constant 0 : index
    %4 = vector.load %arg3[%c0_5, %c0_6, %c0_7] : memref<8x2x32xf32, #tpu.memory_space<vmem>>, vector<8x2x32xf32>
    tpu.vector_store %arg3[%c0_5, %c0_6, %c0_7], %3 {strides = array<i32>} : memref<8x2x32xf32, #tpu.memory_space<vmem>>, vector<8x2x32xf32>,
    return
  }
  func.func @transform_0(%arg0: i32) -> (i32, i32, i32) {
    %c0_i32 = arith.constant 0 : i32
    %c0_i32_0 = arith.constant 0 : i32
    %c0_i32_1 = arith.constant 0 : i32
    return %arg0, %c0_i32, %c0_i32_0 : i32, i32, i32
  }
  func.func @transform_1(%arg0: i32) -> (i32, i32, i32) {
    %c0_i32 = arith.constant 0 : i32
    %c0_i32_0 = arith.constant 0 : i32
    %c0_i32_1 = arith.constant 0 : i32
    return %arg0, %c0_i32, %c0_i32_0 : i32, i32, i32
  }
  func.func @transform_2(%arg0: i32) -> (i32, i32, i32) {
    %c0_i32 = arith.constant 0 : i32
    %c0_i32_0 = arith.constant 0 : i32
    %c0_i32_1 = arith.constant 0 : i32
    return %arg0, %c0_i32, %c0_i32_0 : i32, i32, i32
  }
}

</mosaic_0001>

<llo_original>
// kernel: tpu_custom_call.1
$region0: #{tpu_custom_call.1}
  #allocation0 [shape = 'u32[]', space=smem, size = 0x4, offset = 0x4, fixed_abs, tag = 'smem constant byte address 0x4 - core index']
  #allocation1 [shape = 'u32[144,128]{1,0:T(1,128)}', space=vmem, size = 0x12000, scoped, tag = 'internal scratch']
  %s0 = inlined_call_operand.hbm [shape: f32[8,2,32], index: 0, kind: input, shape index: {}, may-alias: {0,2}]
  %s1 = inlined_call_operand.vmem [shape: f32[64,1,32], index: 1, kind: input, shape index: {}]
  %s2 = inlined_call_operand.hbm [shape: f32[8,2,32], index: 2, kind: output, shape index: {}, may-alias: {0,2}]
  %s3 = sld [smem:[#allocation0]]
  $region22: #{tpu_custom_call.1} parent=0
    _
  %s5 = ssub.s32 1, %s3
  %s6 = scalar_select 0, %s5, %s3
  $region1: #{tpu_custom_call.1} parent=0
    #allocation2 [shape = 'u8[8192]{0}', space=vmem, size = 0x2000, scoped, tag = 'input window, operand 0, single buffered']
    #allocation3 [shape = 's32[1]{0}', space=sflag, size = 0x4, scoped, tag = 'scoped memory for tpu_custom_call.1']
    #allocation4 [shape = 's32[1]{0}', space=sflag, size = 0x4, scoped, tag = 'scoped memory for tpu_custom_call.1']
    #allocation5 [shape = 'u8[8192]{0}', space=vmem, size = 0x2000, scoped, tag = 'output window, operand 0, single buffered']
    %7 = vsyncpa [#allocation3], 0
    %8 = vsyncpa [#allocation4], 0
    // Predicated region
    $region2: #{tpu_custom_call.1} parent=1 // pred_check
      _
    $region3: #{tpu_custom_call.1} parent=1 // pred_check_branch
      %10 = sbr.rel (0) target = $region5
    $region4: #{tpu_custom_call.1} parent=1 // pred_region
      %s12 = ssub.s32 256, 256
      %13 = vsyncadd [#allocation3], %s12
      %s14 = sshll.u32 [#allocation2], 4
      %s15 = int_to_ptr.vmem [resolvable:$true] %s14
      %20 = dma.hbm_to_vmem [thread:$0]  %s0, 256, %s15, [#allocation3], 32, 32, 2
    $region5: #{tpu_custom_call.1} parent=1 // pred_fallthru
      _
    // Predicated region
    $region6: #{tpu_custom_call.1} parent=1 // pred_check
      _
    $region7: #{tpu_custom_call.1} parent=1 // pred_check_branch
      %22 = sbr.rel (0) target = $region9
    $region8: #{tpu_custom_call.1} parent=1 // pred_region
      _
    $region9: #{tpu_custom_call.1} parent=1 // pred_fallthru
      _
    // Predicated region
    $region10: #{tpu_custom_call.1} parent=1 // pred_check
      _
    $region11: #{tpu_custom_call.1} parent=1 // pred_check_branch
      %24 = sbr.rel (0) target = $region13
    $region12: #{tpu_custom_call.1} parent=1 // pred_region
      %25 = dma.done [#allocation3], 256
    $region13: #{tpu_custom_call.1} parent=1 // pred_fallthru
      _
    %v26 = vld [vmem:[#allocation2] sm:$0x3]
    %v27 = vld [vmem:[#allocation2 + $0x2] sm:$0x3]
    %v28 = vld [vmem:[#allocation2 + $0x4] sm:$0x3]
    %v29 = vld [vmem:[#allocation2 + $0x6] sm:$0x3]
    %v30 = vld [vmem:[#allocation2 + $0x8] sm:$0x3]
    %v31 = vld [vmem:[#allocation2 + $0xa] sm:$0x3]
    %v32 = vld [vmem:[#allocation2 + $0xc] sm:$0x3]
    %v33 = vld [vmem:[#allocation2 + $0xe] sm:$0x3]
    %v34 = vld [vmem:[%s1] sm:$0x1]
    %v35 = vld [vmem:[%s1 + $0x1] sm:$0x1]
    %v36 = vld [vmem:[%s1 + $0x2] sm:$0x1]
    %v37 = vld [vmem:[%s1 + $0x3] sm:$0x1]
    %v38 = vld [vmem:[%s1 + $0x4] sm:$0x1]
    %v39 = vld [vmem:[%s1 + $0x5] sm:$0x1]
    %v40 = vld [vmem:[%s1 + $0x6] sm:$0x1]
    %v41 = vld [vmem:[%s1 + $0x7] sm:$0x1]
    %v50 = vlaneseq
    %v51 = vshrl.u32 %v50, 7
    %v52 = vsub.s32 0, %v51
    %v53 = vrot.slane %v34, %v52
    %v54 = vlaneseq
    %v55 = vshrl.u32 %v54, 7
    %v56 = vsub.s32 0, %v55
    %v57 = vrot.slane %v35, %v56
    %v58 = vlaneseq
    %v59 = vshrl.u32 %v58, 7
    %v60 = vsub.s32 0, %v59
    %v61 = vrot.slane %v36, %v60
    %v62 = vlaneseq
    %v63 = vshrl.u32 %v62, 7
    %v64 = vsub.s32 0, %v63
    %v65 = vrot.slane %v37, %v64
    %v66 = vlaneseq
    %v67 = vshrl.u32 %v66, 7
    %v68 = vsub.s32 0, %v67
    %v69 = vrot.slane %v38, %v68
    %v70 = vlaneseq
    %v71 = vshrl.u32 %v70, 7
    %v72 = vsub.s32 0, %v71
    %v73 = vrot.slane %v39, %v72
    %v74 = vlaneseq
    %v75 = vshrl.u32 %v74, 7
    %v76 = vsub.s32 0, %v75
    %v77 = vrot.slane %v40, %v76
    %v78 = vlaneseq
    %v79 = vshrl.u32 %v78, 7
    %v80 = vsub.s32 0, %v79
    %v81 = vrot.slane %v41, %v80
    %v90 = vadd.f32 %v26, %v53
    %v91 = vadd.f32 %v27, %v57
    %v92 = vadd.f32 %v28, %v61
    %v93 = vadd.f32 %v29, %v65
    %v94 = vadd.f32 %v30, %v69
    %v95 = vadd.f32 %v31, %v73
    %v96 = vadd.f32 %v32, %v77
    %v97 = vadd.f32 %v33, %v81
    %vm98 = vcmask 254976
    %99 = vst.msk [vmem:[#allocation5] sm:$0x3] %vm98, %v90
    %100 = vst.msk [vmem:[#allocation5 + $0x2] sm:$0x3] %vm98, %v91
    %101 = vst.msk [vmem:[#allocation5 + $0x4] sm:$0x3] %vm98, %v92
    %102 = vst.msk [vmem:[#allocation5 + $0x6] sm:$0x3] %vm98, %v93
    %103 = vst.msk [vmem:[#allocation5 + $0x8] sm:$0x3] %vm98, %v94
    %104 = vst.msk [vmem:[#allocation5 + $0xa] sm:$0x3] %vm98, %v95
    %105 = vst.msk [vmem:[#allocation5 + $0xc] sm:$0x3] %vm98, %v96
    %106 = vst.msk [vmem:[#allocation5 + $0xe] sm:$0x3] %vm98, %v97
    // Predicated region
    $region14: #{tpu_custom_call.1} parent=1 // pred_check
      _
    $region15: #{tpu_custom_call.1} parent=1 // pred_check_branch
      %108 = sbr.rel (0) target = $region17
    $region16: #{tpu_custom_call.1} parent=1 // pred_region
      %s110 = ssub.s32 256, 256
      %111 = vsyncadd [#allocation4], %s110
      %s112 = sshll.u32 [#allocation5], 4
      %s113 = int_to_ptr.vmem [resolvable:$true] %s112
      %118 = dma.vmem_to_hbm [thread:$0]  %s113, 256, %s2, [#allocation4], 32, 32, 2
    $region17: #{tpu_custom_call.1} parent=1 // pred_fallthru
      _
    // Predicated region
    $region18: #{tpu_custom_call.1} parent=1 // pred_check
      _
    $region19: #{tpu_custom_call.1} parent=1 // pred_check_branch
      %120 = sbr.rel (0) target = $region21
    $region20: #{tpu_custom_call.1} parent=1 // pred_region
      %121 = dma.done [#allocation4], 256
    $region21: #{tpu_custom_call.1} parent=1 // pred_fallthru
      _
    %122 = vsyncpa [#allocation3], 1
    %123 = vsyncpa [#allocation4], 1

</llo_original>
